<compile_context>
chip_gen: v7x
topology: tpu7x:2x2x1
jax: 0.10.0
libtpu: 0.0.40
codegen_flags: <defaults>
</compile_context>

<pallas_src>
import jax
import jax.numpy as jnp
from jax.experimental import pallas as pl
from jax.experimental.pallas import tpu as pltpu


def _qkv_sum_kernel(x_ref, w_ref, o_ref):
    # x_ref: (tm, dim), w_ref: (dim, inner), o_ref: (tm, inner)
    o_ref[...] = jnp.dot(
        x_ref[...], w_ref[...], preferred_element_type=jnp.float32
    ).astype(o_ref.dtype)


def _round_up(x, m):
    return ((x + m - 1) // m) * m


def slices_vit_forward(x, w_qkv_t, heads, dim_head, *, tm=512, compute_dtype=None):
    """SlicesViT forward.

    x:        (b, n, dim)      input tokens
    w_qkv_t:  (dim, 3*inner)   transposed to_qkv weight (inner = heads*dim_head)
    returns   (b, heads, n, dim_head) == q + k + v
    """
    b, n, dim = x.shape
    inner = heads * dim_head
    assert w_qkv_t.shape == (dim, 3 * inner)

    # Exact algebraic fold: q + k + v == x @ (Wq^T + Wk^T + Wv^T). One-time
    # O(dim * 3*inner) add in XLA; kernel then streams 1/3 of the weight.
    w_folded = (w_qkv_t[:, 0 * inner:1 * inner]
                + w_qkv_t[:, 1 * inner:2 * inner]
                + w_qkv_t[:, 2 * inner:3 * inner])

    out_dtype = x.dtype
    if compute_dtype is not None:
        x = x.astype(compute_dtype)
        w_folded = w_folded.astype(compute_dtype)

    M = b * n
    x2d = x.reshape(M, dim)

    # Row tile: multiple of 8 for 32-bit, 16 for sub-32-bit dtypes.
    row_align = 8 if x2d.dtype.itemsize == 4 else 16
    tm_eff = min(_round_up(tm, row_align), _round_up(M, row_align))
    # Keep >= 2 grid blocks when there is enough work (keeps both v7x TCs busy).
    if M >= 2 * row_align and _round_up(M, tm_eff) // tm_eff < 2:
        tm_eff = _round_up(pl.cdiv(M, 2), row_align)

    M_pad = _round_up(M, tm_eff)
    if M_pad != M:
        x2d = jnp.pad(x2d, ((0, M_pad - M), (0, 0)))
    grid_m = M_pad // tm_eff

    in_itemsize = x2d.dtype.itemsize
    out_itemsize = jnp.dtype(out_dtype).itemsize
    cost = pl.CostEstimate(
        flops=2 * M_pad * dim * inner,
        transcendentals=0,
        bytes_accessed=(M_pad * dim * in_itemsize
                        + dim * inner * in_itemsize
                        + M_pad * inner * out_itemsize),
    )

    # Explicit VMEM budget: double-buffered x/out tiles + resident folded weight
    # (double-buffered by the pipeline), clamped below v7x's 64 MiB physical.
    vmem_needed = 2 * (tm_eff * dim * in_itemsize
                       + dim * inner * in_itemsize
                       + tm_eff * inner * out_itemsize)
    vmem_limit = int(min(max(vmem_needed + (4 << 20), 16 << 20), 64 << 20))

    out2d = pl.pallas_call(
        _qkv_sum_kernel,
        out_shape=jax.ShapeDtypeStruct((M_pad, inner), out_dtype),
        grid_spec=pltpu.PrefetchScalarGridSpec(
            num_scalar_prefetch=0,
            grid=(grid_m,),
            in_specs=[
                pl.BlockSpec((tm_eff, dim), lambda i: (i, 0)),
                pl.BlockSpec((dim, inner), lambda i: (0, 0)),
            ],
            out_specs=pl.BlockSpec((tm_eff, inner), lambda i: (i, 0)),
        ),
        compiler_params=pltpu.CompilerParams(
            dimension_semantics=("parallel",),
            vmem_limit_bytes=vmem_limit,
        ),
        cost_estimate=cost,
    )(x2d, w_folded)

    out2d = out2d[:M]
    # rearrange 'b n (h d) -> b h n d' (lane-dense kernel output; transpose in
    # XLA glue, never inside the kernel).
    return out2d.reshape(b, n, heads, dim_head).transpose(0, 2, 1, 3)


def reference_forward(x, w_qkv_t, heads, dim_head):
    b, n, dim = x.shape
    inner = heads * dim_head
    qkv = x @ w_qkv_t                                  # (b, n, 3*inner)
    q, k, v = jnp.split(qkv, 3, axis=-1)

    def rearr(t):
        return t.reshape(b, n, heads, dim_head).transpose(0, 2, 1, 3)

    return rearr(q) + rearr(k) + rearr(v)


if __name__ == "__main__":
    # Small shapes consistent with the module: dim=32, heads=4, dim_head=32
    b, n, dim = 2, 8, 32
    heads, dim_head = 4, 32
    inner = heads * dim_head

    key = jax.random.PRNGKey(0)
    kx, kw = jax.random.split(key)
    x = jax.random.normal(kx, (b, n, dim), dtype=jnp.float32)
    # PyTorch Linear weight is (3*inner, dim); we pass its transpose (dim, 3*inner).
    w_qkv = jax.random.normal(kw, (3 * inner, dim), dtype=jnp.float32) * 0.02
    w_qkv_t = w_qkv.T

    out = slices_vit_forward(x, w_qkv_t, heads, dim_head)
    out = jax.block_until_ready(out)

    ref = reference_forward(x, w_qkv_t, heads, dim_head)
    assert out.shape == (b, heads, n, dim_head)
    assert jnp.allclose(out, ref, atol=1e-5, rtol=1e-5)

    # NOTE: self.norm (LayerNorm) is constructed in __init__ but never used in
    # the PyTorch forward, so it is intentionally not applied here.
    print("KERNEL_OK")
</pallas_src>

<mosaic_0001>
module attributes {stable_mosaic.version = 11 : i64} {
  func.func @_qkv_sum_kernel(%arg0: i32, %arg1: memref<8x32xf32, #tpu.memory_space<vmem>>, %arg2: memref<32x128xf32, #tpu.memory_space<vmem>>, %arg3: memref<8x128xf32, #tpu.memory_space<vmem>>) attributes {dimension_semantics = [#tpu.dimension_semantics<parallel>], iteration_bounds = array<i64: 2>, scalar_prefetch = 0 : i64, scratch_operands = 0 : i64, tpu.core_type = #tpu.core_type<tc>, window_params = [{transform_indices = @transform_0, window_bounds = array<i64: 8, 32>}, {pipeline_mode = #tpu.pipeline_mode<synchronous>, transform_indices = @transform_1, window_bounds = array<i64: 32, 128>}, {transform_indices = @transform_2, window_bounds = array<i64: 8, 128>}]} {
    %c0 = arith.constant 0 : index
    %c0_0 = arith.constant 0 : index
    %0 = vector.load %arg1[%c0, %c0_0] : memref<8x32xf32, #tpu.memory_space<vmem>>, vector<8x32xf32>
    %c0_1 = arith.constant 0 : index
    %c0_2 = arith.constant 0 : index
    %1 = vector.load %arg2[%c0_1, %c0_2] : memref<32x128xf32, #tpu.memory_space<vmem>>, vector<32x128xf32>
    %cst = arith.constant dense<0.000000e+00> : vector<8x128xf32>
    %2 = tpu.matmul %0, %1, %cst {dimension_numbers = #tpu.dot_dimension_numbers<[1], [0], [0], [1], [0, 0, 1, 1], [], []>} : vector<8x32xf32>, vector<32x128xf32>, vector<8x128xf32> -> vector<8x128xf32>
    %c0_3 = arith.constant 0 : index
    %c0_4 = arith.constant 0 : index
    %3 = vector.load %arg3[%c0_3, %c0_4] : memref<8x128xf32, #tpu.memory_space<vmem>>, vector<8x128xf32>
    tpu.vector_store %arg3[%c0_3, %c0_4], %2 {strides = array<i32>} : memref<8x128xf32, #tpu.memory_space<vmem>>, vector<8x128xf32>,
    return
  }
  func.func @transform_0(%arg0: i32) -> (i32, i32) {
    %c0_i32 = arith.constant 0 : i32
    %c0_i32_0 = arith.constant 0 : i32
    return %arg0, %c0_i32 : i32, i32
  }
  func.func @transform_1(%arg0: i32) -> (i32, i32) {
    %c0_i32 = arith.constant 0 : i32
    %c0_i32_0 = arith.constant 0 : i32
    %c0_i32_1 = arith.constant 0 : i32
    return %c0_i32, %c0_i32_0 : i32, i32
  }
  func.func @transform_2(%arg0: i32) -> (i32, i32) {
    %c0_i32 = arith.constant 0 : i32
    %c0_i32_0 = arith.constant 0 : i32
    return %arg0, %c0_i32 : i32, i32
  }
}

</mosaic_0001>

<llo_original>
// kernel: tpu_custom_call.1
$region0: #{tpu_custom_call.1}
  #allocation0 [shape = 'u32[]', space=smem, size = 0x4, offset = 0x4, fixed_abs, tag = 'smem constant byte address 0x4 - core index']
  #allocation1 [shape = 'u32[144,128]{1,0:T(1,128)}', space=vmem, size = 0x12000, scoped, tag = 'internal scratch']
  %s0 = inlined_call_operand.hbm [shape: f32[16,32], index: 0, kind: input, shape index: {}]
  %s1 = inlined_call_operand.hbm [shape: f32[32,128], index: 1, kind: input, shape index: {}]
  %s2 = inlined_call_operand.hbm [shape: f32[16,128], index: 2, kind: output, shape index: {}]
  %s3 = sld [smem:[#allocation0]]
  $region49: #{tpu_custom_call.1} parent=0
    _
  %s5 = ssub.s32 1, %s3
  %s6 = scalar_select 0, %s5, %s3
  $region1: #{tpu_custom_call.1} parent=0
    #allocation2 [shape = 'u8[8192]{0}', space=vmem, size = 0x2000, scoped, tag = 'input window, operand 0']
    #allocation3 [shape = 's32[2]{0}', space=sflag, size = 0x8, scoped, tag = 'scoped memory for tpu_custom_call.1']
    #allocation4 [shape = 's32[2]{0}', space=sflag, size = 0x8, scoped, tag = 'scoped memory for tpu_custom_call.1']
    #allocation5 [shape = 'u8[16384]{0}', space=vmem, size = 0x4000, scoped, tag = 'input window, operand 1, single buffered']
    #allocation6 [shape = 's32[1]{0}', space=sflag, size = 0x4, scoped, tag = 'scoped memory for tpu_custom_call.1']
    #allocation7 [shape = 'u8[8192]{0}', space=vmem, size = 0x2000, scoped, tag = 'output window, operand 0']
    %7 = vsyncpa [#allocation3], 0
    %s8 = scalar_lea.sflag [#allocation3], 1
    %9 = vsyncpa %s8, 0
    %10 = vsyncpa [#allocation6], 0
    %11 = vsyncpa [#allocation4], 0
    %s12 = scalar_lea.sflag [#allocation4], 1
    %13 = vsyncpa %s12, 0
    loop: start=0, step=1, limit=4
    $region2: #{tpu_custom_call.1} parent=1 // loop_pre_header
      _
    $region3: #{tpu_custom_call.1} parent=1 // loop_header
      %s15 = sphi 0, %s19
      %p16 = scmp.ge.s32.totalorder %s15, 4
      %s25 = sphi 0, %s27
      %s28 = sphi 0, %s25
      %s29 = sphi 0, %s28
      %s45 = sphi 0, %s29
      %s49 = sphi 0, %s49
      %s51 = sphi 0, %s49
      %s52 = sphi 0, %s51
      %s66 = sphi 0, %s52
      %s72 = sphi 0, %s74
      %s75 = sphi 0, %s72
      %s76 = sphi 0, %s75
      %s92 = sphi 0, %s76
    $region4: #{tpu_custom_call.1} parent=1 // loop_header_branch
      %18 = sbr.rel (%p16) target = $region8
    $region5: #{tpu_custom_call.1} parent=1 // loop_body
      %s20 = ssub.s32 %s15, 1
      %s21 = ssub.s32 %s15, 2
      %s22 = sadd.s32 %s15, 1
      %s23 = ssub.s32 %s15, %s22
      %p24 = scmp.eq.s32.totalorder %s23, 0
      %s26 = sadd.s32 %s25, 1
      %s27 = scalar_select %p24, %s25, %s26
      %p30 = pneg %p24
      %p31 = scmp.eq.s32.totalorder %s15, 1
      %p32 = por %p30, %p31
      %p33 = scmp.ne.s32.totalorder %s25, %s28
      %p34 = scmp.eq.s32.totalorder %s15, 0
      %p35 = por %p33, %p34
      %p36 = scmp.ne.s32.totalorder %s25, %s28
      %p37 = scmp.eq.s32.totalorder %s20, 1
      %p38 = por %p36, %p37
      %p39 = scmp.ne.s32.totalorder %s28, %s29
      %p40 = scmp.eq.s32.totalorder %s20, 0
      %p41 = por %p39, %p40
      %p42 = scmp.ne.s32.totalorder %s28, %s29
      %p43 = scmp.eq.s32.totalorder %s21, 1
      %p44 = por %p42, %p43
      %p46 = scmp.ne.s32.totalorder %s29, %s45
      %p47 = scmp.eq.s32.totalorder %s21, 0
      %p48 = por %p46, %p47
      %s50 = sadd.s32 %s49, 1
      %p53 = scmp.eq.s32.totalorder %s15, 1
      %p54 = scmp.ne.s32.totalorder %s49, %s51
      %p55 = scmp.eq.s32.totalorder %s15, 0
      %p56 = por %p54, %p55
      %p57 = scmp.ne.s32.totalorder %s49, %s51
      %p58 = scmp.eq.s32.totalorder %s20, 1
      %p59 = por %p57, %p58
      %p60 = scmp.ne.s32.totalorder %s51, %s52
      %p61 = scmp.eq.s32.totalorder %s20, 0
      %p62 = por %p60, %p61
      %p63 = scmp.ne.s32.totalorder %s51, %s52
      %p64 = scmp.eq.s32.totalorder %s21, 1
      %p65 = por %p63, %p64
      %p67 = scmp.ne.s32.totalorder %s52, %s66
      %p68 = scmp.eq.s32.totalorder %s21, 0
      %p69 = por %p67, %p68
      %s70 = ssub.s32 %s15, %s22
      %p71 = scmp.eq.s32.totalorder %s70, 0
      %s73 = sadd.s32 %s72, 1
      %s74 = scalar_select %p71, %s72, %s73
      %p77 = pneg %p71
      %p78 = scmp.eq.s32.totalorder %s15, 1
      %p79 = por %p77, %p78
      %p80 = scmp.ne.s32.totalorder %s72, %s75
      %p81 = scmp.eq.s32.totalorder %s15, 0
      %p82 = por %p80, %p81
      %p83 = scmp.ne.s32.totalorder %s72, %s75
      %p84 = scmp.eq.s32.totalorder %s20, 1
      %p85 = por %p83, %p84
      %p86 = scmp.ne.s32.totalorder %s75, %s76
      %p87 = scmp.eq.s32.totalorder %s20, 0
      %p88 = por %p86, %p87
      %p89 = scmp.ne.s32.totalorder %s75, %s76
      %p90 = scmp.eq.s32.totalorder %s21, 1
      %p91 = por %p89, %p90
      %p93 = scmp.ne.s32.totalorder %s76, %s92
      %p94 = scmp.eq.s32.totalorder %s21, 0
      %p95 = por %p93, %p94
      %p96 = scmp.le.s32.totalorder 1, %s15
      %p97 = scmp.lt.s32.totalorder %s15, 3
      %p98 = pnand %p96, %p97
      %p99 = pneg %p98
      // Predicated region
      $region9: #{tpu_custom_call.1} parent=5 // pred_check
        _
      $region10: #{tpu_custom_call.1} parent=5 // pred_check_branch
        %101 = sbr.rel (%p98) target = $region12
      $region11: #{tpu_custom_call.1} parent=5 // pred_region
        %s102 = ssub.s32 %s15, 1
        // Predicated region
        $region13: #{tpu_custom_call.1} parent=11 // pred_check
          %p103 = pneg %p62
        $region14: #{tpu_custom_call.1} parent=11 // pred_check_branch
          %105 = sbr.rel (%p103) target = $region16
        $region15: #{tpu_custom_call.1} parent=11 // pred_region
          %s107 = ssub.s32 512, 512
          %108 = vsyncadd [#allocation6], %s107
          %s109 = sshll.u32 [#allocation5], 4
          %s110 = int_to_ptr.vmem [resolvable:$true] %s109
          %115 = dma.hbm_to_vmem [thread:$0]  %s1, 512, %s110, [#allocation6], 128, 128, 8
        $region16: #{tpu_custom_call.1} parent=11 // pred_fallthru
          _
      $region12: #{tpu_custom_call.1} parent=5 // pred_fallthru
        _
      %p116 = scmp.lt.s32.totalorder %s15, 2
      // Predicated region
      $region17: #{tpu_custom_call.1} parent=5 // pred_check
        %p117 = pneg %p116
      $region18: #{tpu_custom_call.1} parent=5 // pred_check_branch
        %119 = sbr.rel (%p117) target = $region20
      $region19: #{tpu_custom_call.1} parent=5 // pred_region
        // Predicated region
        $region21: #{tpu_custom_call.1} parent=19 // pred_check
          %p120 = pneg %p35
        $region22: #{tpu_custom_call.1} parent=19 // pred_check_branch
          %122 = sbr.rel (%p120) target = $region24
        $region23: #{tpu_custom_call.1} parent=19 // pred_region
          %s123 = sand.u32 %s25, 1
          %s124 = scalar_lea.sflag [#allocation3], %s123
          %s125 = sand.u32 %s25, 1
          %s126 = smul.addr %s125, 8
          %s127 = scalar_lea.vmem [#allocation2], %s126
          %s129 = ssub.s32 128, 128
          %130 = vsyncadd %s124, %s129
          %s131 = smul.addr %s15, 128
          %s132 = scalar_lea.hbm %s0, %s131
          %s134 = sshll.u32 %s127, 4
          %s135 = int_to_ptr.vmem [resolvable:$true] %s134
          %137 = dma.hbm_to_vmem [thread:$0]  %s132, 128, %s135, %s124
        $region24: #{tpu_custom_call.1} parent=19 // pred_fallthru
          _
      $region20: #{tpu_custom_call.1} parent=5 // pred_fallthru
        _
      %p138 = scmp.le.s32.totalorder 1, %s15
      %p139 = scmp.lt.s32.totalorder %s15, 3
      %p140 = pnand %p138, %p139
      %p141 = pneg %p140
      // Predicated region
      $region25: #{tpu_custom_call.1} parent=5 // pred_check
        _
      $region26: #{tpu_custom_call.1} parent=5 // pred_check_branch
        %143 = sbr.rel (%p140) target = $region28
      $region27: #{tpu_custom_call.1} parent=5 // pred_region
        %s144 = ssub.s32 %s15, 1
        %s145 = sand.u32 %s28, 1
        %s146 = scalar_lea.sflag [#allocation3], %s145
        %s147 = sand.u32 %s28, 1
        %s148 = smul.addr %s147, 8
        %s149 = scalar_lea.vmem [#allocation2], %s148
        // Predicated region
        $region29: #{tpu_custom_call.1} parent=27 // pred_check
          %p150 = pneg %p41
        $region30: #{tpu_custom_call.1} parent=27 // pred_check_branch
          %152 = sbr.rel (%p150) target = $region32
        $region31: #{tpu_custom_call.1} parent=27 // pred_region
          %153 = dma.done %s146, 128
        $region32: #{tpu_custom_call.1} parent=27 // pred_fallthru
          _
        // Predicated region
        $region33: #{tpu_custom_call.1} parent=27 // pred_check
          %p154 = pneg %p62
        $region34: #{tpu_custom_call.1} parent=27 // pred_check_branch
          %156 = sbr.rel (%p154) target = $region36
        $region35: #{tpu_custom_call.1} parent=27 // pred_region
          %157 = dma.done [#allocation6], 512
        $region36: #{tpu_custom_call.1} parent=27 // pred_fallthru
          _
        %s158 = sand.u32 %s28, 1
        %s159 = scalar_lea.sflag [#allocation3], %s158
        %s160 = sand.u32 %s28, 1
        %s161 = smul.addr %s160, 8
        %s162 = scalar_lea.vmem [#allocation2], %s161
        %p163 = pneg %p41
        %p164 = pneg %p38
        %p165 = pneg %p62
        %p166 = pneg %p59
        %p167 = pneg %p88
        %p168 = pneg %p85
        %s169 = sand.u32 %s75, 1
        %s170 = scalar_lea.sflag [#allocation4], %s169
        %s171 = sand.u32 %s75, 1
        %s172 = smul.addr %s171, 8
        %s173 = scalar_lea.vmem [#allocation7], %s172
        %v174 = vld [vmem:[%s149] sm:$0xff]
        %v175 = vld [vmem:[#allocation5] sm:$0xff]
        %v176 = vld [vmem:[#allocation5 + $0x8] sm:$0xff]
        %v177 = vld [vmem:[#allocation5 + $0x10] sm:$0xff]
        %v178 = vld [vmem:[#allocation5 + $0x18] sm:$0xff]
        %vm179 = vcmask 261120
        %v181 = vsel %vm179, %v174, 0
        %183 = vmatprep.subr.mxu0 0.0
        %184 = vmatpush1.msra.mxu0 %v175
        %185 = vmatprep.subr.mxu0 0.0
        %186 = vmatpush1.msra.mxu0 %v176
        %187 = vmatprep.subr.mxu0 0.0
        %188 = vmatpush1.msra.mxu0 %v177
        %189 = vmatprep.subr.mxu0 0.0
        %190 = vmatpush1.msra.mxu0 %v178
        %191 = vmatprep.subr.mxu0 0.0
        %192 = vmatpush1.msra.mxu0 0.0
        %193 = vmatprep.subr.mxu0 0.0
        %194 = vmatpush1.msra.mxu0 0.0
        %195 = vmatprep.subr.mxu0 0.0
        %196 = vmatpush1.msra.mxu0 0.0
        %197 = vmatprep.subr.mxu0 0.0
        %198 = vmatpush1.msra.mxu0 0.0
        %199 = vmatprep.subr.mxu0 0.0
        %200 = vmatpush1.msra.mxu0 0.0
        %201 = vmatprep.subr.mxu0 0.0
        %202 = vmatpush1.msra.mxu0 0.0
        %203 = vmatprep.subr.mxu0 0.0
        %204 = vmatpush1.msra.mxu0 0.0
        %205 = vmatprep.subr.mxu0 0.0
        %206 = vmatpush1.msra.mxu0 0.0
        %207 = vmatprep.subr.mxu0 0.0
        %208 = vmatpush1.msra.mxu0 0.0
        %209 = vmatprep.subr.mxu0 0.0
        %210 = vmatpush1.msra.mxu0 0.0
        %211 = vmatprep.subr.mxu0 0.0
        %212 = vmatpush1.msra.mxu0 0.0
        %213 = vmatprep.subr.mxu0 0.0
        %214 = vmatpush1.msra.mxu0 0.0
        %215 = vmatprep.subr.mxu0 0.0
        %216 = vmatpush1.msra.mxu0 0.0
        %217 = vmatprep.subr.mxu0 0.0
        %218 = vmatpush1.msra.mxu0 0.0
        %219 = vmatprep.subr.mxu0 0.0
        %220 = vmatpush1.msra.mxu0 0.0
        %221 = vmatprep.subr.mxu0 0.0
        %222 = vmatpush1.msra.mxu0 0.0
        %223 = vmatprep.subr.mxu0 0.0
        %224 = vmatpush1.msra.mxu0 0.0
        %225 = vmatprep.subr.mxu0 0.0
        %226 = vmatpush1.msra.mxu0 0.0
        %227 = vmatprep.subr.mxu0 0.0
        %228 = vmatpush1.msra.mxu0 0.0
        %229 = vmatprep.subr.mxu0 0.0
        %230 = vmatpush1.msra.mxu0 0.0
        %231 = vmatprep.subr.mxu0 0.0
        %232 = vmatpush1.msra.mxu0 0.0
        %233 = vmatprep.subr.mxu0 0.0
        %234 = vmatpush1.msra.mxu0 0.0
        %235 = vmatprep.subr.mxu0 0.0
        %236 = vmatpush1.msra.mxu0 0.0
        %237 = vmatprep.subr.mxu0 0.0
        %238 = vmatpush1.msra.mxu0 0.0
        %239 = vmatprep.subr.mxu0 0.0
        %240 = vmatpush1.msra.mxu0 0.0
        %241 = vmatprep.subr.mxu0 0.0
        %242 = vmatpush1.msra.mxu0 0.0
        %243 = vmatprep.subr.mxu0 0.0
        %244 = vmatpush1.msra.mxu0 0.0
        %245 = vmatprep.subr.mxu0 0.0
        %246 = vmatpush1.msra.mxu0 0.0
        %247 = vmatprep.mubr.f32.mxu0 0.0
        %248 = vmatmul.mubr.f32.gmra.mrb[0].mxu0 %v181
        %v249 = vpop.f32.mrb[0].mxu0
        %v250 = vadd.f32 0.0, %v249
        %v251 = vpop.f32.mrb[0].mxu0
        %252 = vdwg.mxu0
        %253 = vst [vmem:[%s173] sm:$0xff] %v250
        %s254 = sand.u32 %s75, 1
        %s255 = scalar_lea.sflag [#allocation4], %s254
        %s256 = sand.u32 %s75, 1
        %s257 = smul.addr %s256, 8
        %s258 = scalar_lea.vmem [#allocation7], %s257
        // Predicated region
        $region37: #{tpu_custom_call.1} parent=27 // pred_check
          %p259 = pneg %p85
        $region38: #{tpu_custom_call.1} parent=27 // pred_check_branch
          %261 = sbr.rel (%p259) target = $region40
        $region39: #{tpu_custom_call.1} parent=27 // pred_region
          %s263 = ssub.s32 128, 128
          %264 = vsyncadd %s255, %s263
          %s265 = smul.addr %s20, 128
          %s266 = scalar_lea.hbm %s2, %s265
          %s268 = sshll.u32 %s258, 4
          %s269 = int_to_ptr.vmem [resolvable:$true] %s268
          %271 = dma.vmem_to_hbm [thread:$0]  %s269, 128, %s266, %s255
        $region40: #{tpu_custom_call.1} parent=27 // pred_fallthru
          _
      $region28: #{tpu_custom_call.1} parent=5 // pred_fallthru
        _
      %p272 = scmp.le.s32.totalorder 2, %s15
      // Predicated region
      $region41: #{tpu_custom_call.1} parent=5 // pred_check
        %p273 = pneg %p272
      $region42: #{tpu_custom_call.1} parent=5 // pred_check_branch
        %275 = sbr.rel (%p273) target = $region44
      $region43: #{tpu_custom_call.1} parent=5 // pred_region
        %s276 = ssub.s32 %s15, 2
        // Predicated region
        $region45: #{tpu_custom_call.1} parent=43 // pred_check
          %p277 = pneg %p91
        $region46: #{tpu_custom_call.1} parent=43 // pred_check_branch
          %279 = sbr.rel (%p277) target = $region48
        $region47: #{tpu_custom_call.1} parent=43 // pred_region
          %s280 = sand.u32 %s76, 1
          %s281 = scalar_lea.sflag [#allocation4], %s280
          %s282 = sand.u32 %s76, 1
          %s283 = smul.addr %s282, 8
          %s284 = scalar_lea.vmem [#allocation7], %s283
          %285 = dma.done %s281, 128
        $region48: #{tpu_custom_call.1} parent=43 // pred_fallthru
          _
      $region44: #{tpu_custom_call.1} parent=5 // pred_fallthru
        _
    $region6: #{tpu_custom_call.1} parent=1 // loop_footer
      %s19 = sadd.s32 1, %s15
    $region7: #{tpu_custom_call.1} parent=1 // loop_footer_branch
      %14 = sbr.rel target = $region3
    $region8: #{tpu_custom_call.1} parent=1 // loop_exit
      _
    %286 = vsyncpa [#allocation3], 1
    %s287 = scalar_lea.sflag [#allocation3], 1
    %288 = vsyncpa %s287, 1
    %289 = vsyncpa [#allocation6], 1
    %290 = vsyncpa [#allocation4], 1
    %s291 = scalar_lea.sflag [#allocation4], 1
    %292 = vsyncpa %s291, 1

</llo_original>
